<compile_context>
chip_gen: v7x
topology: tpu7x:2x2x1
jax: 0.10.0
libtpu: 0.0.40
codegen_flags: <defaults>
</compile_context>

<pallas_src>
import functools

import jax
import jax.numpy as jnp
from jax.experimental import pallas as pl
from jax.experimental.pallas import tpu as pltpu

IGNORE_INDEX = 6
_LANE = 128


def _focal_block(x, t, *, alpha, gamma):
    """x: (C, t_hw) f32 logits; t: (1, t_hw) i32 labels -> (1, t_hw) f32 focal."""
    # numerically-stable log-sum-exp over the class (sublane) axis
    m = jnp.max(x, axis=0, keepdims=True)                         # (1, t_hw)
    lse = m + jnp.log(jnp.sum(jnp.exp(x - m), axis=0, keepdims=True))

    # gather the target-class logit via a one-hot select over the C sublanes
    t_safe = jnp.where(t == IGNORE_INDEX, 0, t)                   # keep in range
    classes = jax.lax.broadcasted_iota(jnp.int32, x.shape, 0)
    x_t = jnp.sum(jnp.where(classes == t_safe, x, 0.0), axis=0, keepdims=True)

    # cross entropy; clamp tiny negative fp error, zero out ignored pixels
    ce = jnp.maximum(lse - x_t, 0.0)                              # (1, t_hw)
    ce = jnp.where(t != IGNORE_INDEX, ce, 0.0)

    pt = jnp.exp(-ce)
    w = 1.0 - pt
    if gamma == 2.0:                                              # default: VPU muls, no pow
        return (alpha * ce) * (w * w)
    elif gamma == 1.0:
        return (alpha * ce) * w
    elif gamma == 0.0:
        return alpha * ce
    return (alpha * ce) * jnp.power(jnp.maximum(w, 0.0), gamma)


def _focal_sum_kernel(logits_ref, tgt_ref, out_ref, *, alpha, gamma):
    # logits_ref: (1, C, t_hw)  tgt_ref: (1, 1, t_hw)  out_ref: (1, 1, 8, 128)
    focal = _focal_block(logits_ref[0].astype(jnp.float32), tgt_ref[0],
                         alpha=alpha, gamma=gamma)
    out_ref[...] = jnp.broadcast_to(jnp.sum(focal), out_ref.shape)


def _focal_elem_kernel(logits_ref, tgt_ref, out_ref, *, alpha, gamma):
    # logits_ref: (1, C, t_hw)  tgt_ref: (1, 1, t_hw)  out_ref: (1, 1, t_hw)
    out_ref[0] = _focal_block(logits_ref[0].astype(jnp.float32), tgt_ref[0],
                              alpha=alpha, gamma=gamma)


def focal_loss(inputs, targets, alpha=0.25, gamma=2.0, reduction="mean",
               max_tile_pixels=64 * 1024):
    """inputs: (N, C, H, W) float logits; targets: (N, H, W) integer labels."""
    N, C, H, W = inputs.shape
    HW = H * W

    # tile the H*W lane axis into num_j blocks of t_hw pixels (multiple of 128)
    num_j = -(-HW // max_tile_pixels)
    per_block = -(-HW // num_j)
    t_hw = -(-per_block // _LANE) * _LANE
    HW_pad = t_hw * num_j

    logits = inputs.reshape(N, C, HW)                    # free reshape of NCHW
    tgts = targets.astype(jnp.int32).reshape(N, 1, HW)
    if HW_pad != HW:
        # trailing pixels carry ignore_index -> they contribute exactly 0
        logits = jnp.pad(logits, ((0, 0), (0, 0), (0, HW_pad - HW)))
        tgts = jnp.pad(tgts, ((0, 0), (0, 0), (0, HW_pad - HW)),
                       constant_values=IGNORE_INDEX)

    alpha = float(alpha)
    gamma = float(gamma)
    in_specs = [
        pl.BlockSpec((1, C, t_hw), lambda n, j: (n, 0, j)),
        pl.BlockSpec((1, 1, t_hw), lambda n, j: (n, 0, j)),
    ]
    cparams = pltpu.CompilerParams(
        dimension_semantics=("parallel", "parallel"))

    if reduction in ("mean", "sum"):
        kernel = functools.partial(_focal_sum_kernel, alpha=alpha, gamma=gamma)
        partials = pl.pallas_call(
            kernel,
            out_shape=jax.ShapeDtypeStruct((N, num_j, 8, _LANE), jnp.float32),
            grid_spec=pltpu.PrefetchScalarGridSpec(
                num_scalar_prefetch=0,
                grid=(N, num_j),
                in_specs=in_specs,
                out_specs=pl.BlockSpec((1, 1, 8, _LANE),
                                       lambda n, j: (n, j, 0, 0)),
            ),
            compiler_params=cparams,
        )(logits, tgts)
        # each (8,128) slab holds the same per-block scalar; take one lane each
        total = jnp.sum(partials[:, :, 0, 0])
        if reduction == "mean":
            return total / jnp.float32(N * HW)   # mean over ALL elements
        return total

    if reduction == "none":
        kernel = functools.partial(_focal_elem_kernel, alpha=alpha, gamma=gamma)
        focal = pl.pallas_call(
            kernel,
            out_shape=jax.ShapeDtypeStruct((N, 1, HW_pad), jnp.float32),
            grid_spec=pltpu.PrefetchScalarGridSpec(
                num_scalar_prefetch=0,
                grid=(N, num_j),
                in_specs=in_specs,
                out_specs=pl.BlockSpec((1, 1, t_hw), lambda n, j: (n, 0, j)),
            ),
            compiler_params=cparams,
        )(logits, tgts)
        return focal[:, 0, :HW].reshape(N, H, W)

    raise ValueError(f"unknown reduction: {reduction!r}")


def _focal_loss_ref_elems(inputs, targets, alpha=0.25, gamma=2.0):
    # pure-JAX reference mirroring F.cross_entropy(..., ignore_index=6) + focal
    N, C, H, W = inputs.shape
    logits = jnp.transpose(inputs, (0, 2, 3, 1)).reshape(-1, C).astype(jnp.float32)
    t = targets.reshape(-1).astype(jnp.int32)
    lse = jax.nn.logsumexp(logits, axis=-1)
    x_t = jnp.take_along_axis(
        logits, jnp.where(t == IGNORE_INDEX, 0, t)[:, None], axis=-1)[:, 0]
    ce = jnp.where(t == IGNORE_INDEX, 0.0, lse - x_t)
    pt = jnp.exp(-ce)
    focal = alpha * (1.0 - pt) ** gamma * ce
    return focal.reshape(N, H, W)


if __name__ == "__main__":
    key = jax.random.PRNGKey(0)
    k1, k2 = jax.random.split(key)

    # small segmentation-style shapes: batch=2, classes=7 (index 6 = ignore), 16x16
    N, C, H, W = 2, 7, 16, 16
    x = jax.random.normal(k1, (N, C, H, W), dtype=jnp.float32)
    y = jax.random.randint(k2, (N, H, W), 0, C, dtype=jnp.int32)  # includes some 6s

    ref_elems = _focal_loss_ref_elems(x, y, alpha=0.25, gamma=2.0)

    loss_mean = jax.block_until_ready(
        focal_loss(x, y, alpha=0.25, gamma=2.0, reduction="mean"))
    assert jnp.allclose(loss_mean, jnp.mean(ref_elems), atol=1e-5, rtol=1e-5), (
        loss_mean, jnp.mean(ref_elems))

    loss_sum = jax.block_until_ready(
        focal_loss(x, y, alpha=0.25, gamma=2.0, reduction="sum"))
    assert jnp.allclose(loss_sum, jnp.sum(ref_elems), atol=1e-4, rtol=1e-5), (
        loss_sum, jnp.sum(ref_elems))

    loss_none = jax.block_until_ready(
        focal_loss(x, y, alpha=0.25, gamma=2.0, reduction="none"))
    assert jnp.allclose(loss_none, ref_elems, atol=1e-5, rtol=1e-5)

    print("KERNEL_OK")
</pallas_src>

<mosaic_0001>
module attributes {stable_mosaic.version = 11 : i64} {
  func.func @_focal_sum_kernel(%arg0: i32, %arg1: i32, %arg2: memref<1x7x256xf32, #tpu.memory_space<vmem>>, %arg3: memref<1x1x256xi32, #tpu.memory_space<vmem>>, %arg4: memref<1x1x8x128xf32, #tpu.memory_space<vmem>>) attributes {dimension_semantics = [#tpu.dimension_semantics<parallel>, #tpu.dimension_semantics<parallel>], iteration_bounds = array<i64: 2, 1>, scalar_prefetch = 0 : i64, scratch_operands = 0 : i64, tpu.core_type = #tpu.core_type<tc>, window_params = [{transform_indices = @transform_0, window_bounds = array<i64: 1, 7, 256>}, {transform_indices = @transform_1, window_bounds = array<i64: 1, 1, 256>}, {transform_indices = @transform_2, window_bounds = array<i64: 1, 1, 8, 128>}]} {
    %c0 = arith.constant 0 : index
    %c0_0 = arith.constant 0 : index
    %c0_1 = arith.constant 0 : index
    %0 = vector.load %arg2[%c0, %c0_0, %c0_1] : memref<1x7x256xf32, #tpu.memory_space<vmem>>, vector<1x7x256xf32>
    %1 = vector.shape_cast %0 : vector<1x7x256xf32> to vector<7x256xf32>
    %c0_2 = arith.constant 0 : index
    %c0_3 = arith.constant 0 : index
    %c0_4 = arith.constant 0 : index
    %2 = vector.load %arg3[%c0_2, %c0_3, %c0_4] : memref<1x1x256xi32, #tpu.memory_space<vmem>>, vector<1x1x256xi32>
    %3 = vector.shape_cast %2 : vector<1x1x256xi32> to vector<1x256xi32>
    %cst = arith.constant dense<0xFF800000> : vector<256xf32>
    %4 = vector.multi_reduction <maximumf>, %1, %cst [0] : vector<7x256xf32> to vector<256xf32>
    %5 = vector.shape_cast %4 : vector<256xf32> to vector<1x256xf32>
    %6 = vector.broadcast %5 : vector<1x256xf32> to vector<7x256xf32>
    %7 = arith.subf %1, %6 : vector<7x256xf32>
    %8 = math.exp %7 : vector<7x256xf32>
    %cst_5 = arith.constant dense<0.000000e+00> : vector<256xf32>
    %9 = vector.multi_reduction <add>, %8, %cst_5 [0] : vector<7x256xf32> to vector<256xf32>
    %10 = vector.shape_cast %9 : vector<256xf32> to vector<1x256xf32>
    %11 = math.log %10 : vector<1x256xf32>
    %12 = arith.addf %5, %11 : vector<1x256xf32>
    %c6_i32 = arith.constant 6 : i32
    %13 = vector.broadcast %c6_i32 : i32 to vector<1x256xi32>
    %14 = arith.cmpi eq, %3, %13 : vector<1x256xi32>
    %c0_i32 = arith.constant 0 : i32
    %15 = vector.broadcast %c0_i32 : i32 to vector<1x256xi32>
    %16 = arith.select %14, %15, %3 : vector<1x256xi1>, vector<1x256xi32>
    %17 = tpu.iota {dimensions = array<i32: 0>} : vector<7x256xi32>
    %18 = vector.broadcast %16 : vector<1x256xi32> to vector<7x256xi32>
    %19 = arith.cmpi eq, %17, %18 : vector<7x256xi32>
    %cst_6 = arith.constant 0.000000e+00 : f32
    %20 = vector.broadcast %cst_6 : f32 to vector<7x256xf32>
    %21 = arith.select %19, %1, %20 : vector<7x256xi1>, vector<7x256xf32>
    %cst_7 = arith.constant dense<0.000000e+00> : vector<256xf32>
    %22 = vector.multi_reduction <add>, %21, %cst_7 [0] : vector<7x256xf32> to vector<256xf32>
    %23 = vector.shape_cast %22 : vector<256xf32> to vector<1x256xf32>
    %24 = arith.subf %12, %23 : vector<1x256xf32>
    %cst_8 = arith.constant 0.000000e+00 : f32
    %25 = vector.broadcast %cst_8 : f32 to vector<1x256xf32>
    %26 = arith.maximumf %24, %25 : vector<1x256xf32>
    %c6_i32_9 = arith.constant 6 : i32
    %27 = vector.broadcast %c6_i32_9 : i32 to vector<1x256xi32>
    %28 = arith.cmpi ne, %3, %27 : vector<1x256xi32>
    %cst_10 = arith.constant 0.000000e+00 : f32
    %29 = vector.broadcast %cst_10 : f32 to vector<1x256xf32>
    %30 = arith.select %28, %26, %29 : vector<1x256xi1>, vector<1x256xf32>
    %cst_11 = arith.constant 0.000000e+00 : f32
    %31 = vector.broadcast %cst_11 : f32 to vector<1x256xf32>
    %32 = arith.subf %31, %30 : vector<1x256xf32>
    %33 = math.exp %32 : vector<1x256xf32>
    %cst_12 = arith.constant 1.000000e+00 : f32
    %34 = vector.broadcast %cst_12 : f32 to vector<1x256xf32>
    %35 = arith.subf %34, %33 : vector<1x256xf32>
    %cst_13 = arith.constant 2.500000e-01 : f32
    %36 = vector.broadcast %cst_13 : f32 to vector<1x256xf32>
    %37 = arith.mulf %36, %30 : vector<1x256xf32>
    %38 = arith.mulf %35, %35 : vector<1x256xf32>
    %39 = arith.mulf %37, %38 : vector<1x256xf32>
    %40 = vector.shape_cast %39 : vector<1x256xf32> to vector<1x1x256xf32>
    %cst_14 = arith.constant dense<0.000000e+00> : vector<1xf32>
    %41 = vector.multi_reduction <add>, %40, %cst_14 [1, 2] : vector<1x1x256xf32> to vector<1xf32>
    %42 = vector.shape_cast %41 : vector<1xf32> to vector<1x1x1xf32>
    %43 = vector.extract %42[0, 0, 0] : f32 from vector<1x1x1xf32>
    %44 = vector.broadcast %43 : f32 to vector<1x1x8x128xf32>
    %c0_15 = arith.constant 0 : index
    %c0_16 = arith.constant 0 : index
    %c0_17 = arith.constant 0 : index
    %c0_18 = arith.constant 0 : index
    %45 = vector.load %arg4[%c0_15, %c0_16, %c0_17, %c0_18] : memref<1x1x8x128xf32, #tpu.memory_space<vmem>>, vector<1x1x8x128xf32>
    tpu.vector_store %arg4[%c0_15, %c0_16, %c0_17, %c0_18], %44 {strides = array<i32>} : memref<1x1x8x128xf32, #tpu.memory_space<vmem>>, vector<1x1x8x128xf32>,
    return
  }
  func.func @transform_0(%arg0: i32, %arg1: i32) -> (i32, i32, i32) {
    %c0_i32 = arith.constant 0 : i32
    %c0_i32_0 = arith.constant 0 : i32
    return %arg0, %c0_i32, %arg1 : i32, i32, i32
  }
  func.func @transform_1(%arg0: i32, %arg1: i32) -> (i32, i32, i32) {
    %c0_i32 = arith.constant 0 : i32
    %c0_i32_0 = arith.constant 0 : i32
    return %arg0, %c0_i32, %arg1 : i32, i32, i32
  }
  func.func @transform_2(%arg0: i32, %arg1: i32) -> (i32, i32, i32, i32) {
    %c0_i32 = arith.constant 0 : i32
    %c0_i32_0 = arith.constant 0 : i32
    %c0_i32_1 = arith.constant 0 : i32
    return %arg0, %arg1, %c0_i32, %c0_i32_0 : i32, i32, i32, i32
  }
}

</mosaic_0001>

<llo_original>
// kernel: tpu_custom_call.1
$region0: #{tpu_custom_call.1}
  #allocation0 [shape = 'u32[]', space=smem, size = 0x4, offset = 0x4, fixed_abs, tag = 'smem constant byte address 0x4 - core index']
  #allocation1 [shape = 'u32[144,128]{1,0:T(1,128)}', space=vmem, size = 0x12000, scoped, tag = 'internal scratch']
  %s0 = inlined_call_operand.vmem [shape: f32[2,7,256], index: 0, kind: input, shape index: {}]
  %s1 = inlined_call_operand.vmem [shape: s32[2,1,256], index: 1, kind: input, shape index: {}]
  %s2 = inlined_call_operand.hbm [shape: f32[2,1,8,128], index: 2, kind: output, shape index: {}]
  %s3 = sld [smem:[#allocation0]]
  $region41: #{tpu_custom_call.1} parent=0
    _
  %s5 = ssub.s32 1, %s3
  %s6 = scalar_select 0, %s5, %s3
  $region1: #{tpu_custom_call.1} parent=0
    #allocation2 [shape = 'u8[8192]{0}', space=vmem, size = 0x2000, scoped, tag = 'output window, operand 0']
    #allocation3 [shape = 's32[2]{0}', space=sflag, size = 0x8, scoped, tag = 'scoped memory for tpu_custom_call.1']
    %7 = vsyncpa [#allocation3], 0
    %s8 = scalar_lea.sflag [#allocation3], 1
    %9 = vsyncpa %s8, 0
    loop: start=0, step=1, limit=4
    $region2: #{tpu_custom_call.1} parent=1 // loop_pre_header
      _
    $region3: #{tpu_custom_call.1} parent=1 // loop_header
      %s11 = sphi 0, %s15
      %p12 = scmp.ge.s32.totalorder %s11, 4
      %s18 = sphi 0, %s30
      %s19 = sphi 0, %s26
      %s20 = sphi 0, %s18
      %s21 = sphi 0, %s19
      %s22 = sphi 0, %s20
      %s23 = sphi 0, %s21
      %s35 = sphi 0, %s37
      %s38 = sphi 0, %s35
      %s39 = sphi 0, %s38
      %s55 = sphi 0, %s39
      %s63 = sphi 0, %s65
      %s66 = sphi 0, %s63
      %s67 = sphi 0, %s66
      %s83 = sphi 0, %s67
      %s91 = sphi 0, %s93
      %s94 = sphi 0, %s91
      %s95 = sphi 0, %s94
      %s111 = sphi 0, %s95
    $region4: #{tpu_custom_call.1} parent=1 // loop_header_branch
      %14 = sbr.rel (%p12) target = $region8
    $region5: #{tpu_custom_call.1} parent=1 // loop_body
      %s16 = ssub.s32 %s11, 1
      %s17 = ssub.s32 %s11, 2
      %s24 = sadd.s32 1, %s19
      %p25 = scmp.ge.s32.totalorder %s24, 1
      %s26 = scalar_select %p25, 0, %s24
      %s27 = sadd.s32 1, %s18
      %s28 = scalar_select %p25, %s27, %s18
      %p29 = scmp.ge.s32.totalorder %s28, 2
      %s30 = scalar_select %p29, 0, %s28
      %s31 = ssub.s32 %s18, %s30
      %s32 = ssub.s32 %s19, %s26
      %s33 = sor.u32 %s31, %s32
      %p34 = scmp.eq.s32.totalorder %s33, 0
      %s36 = sadd.s32 %s35, 1
      %s37 = scalar_select %p34, %s35, %s36
      %p40 = pneg %p34
      %p41 = scmp.eq.s32.totalorder %s11, 1
      %p42 = por %p40, %p41
      %p43 = scmp.ne.s32.totalorder %s35, %s38
      %p44 = scmp.eq.s32.totalorder %s11, 0
      %p45 = por %p43, %p44
      %p46 = scmp.ne.s32.totalorder %s35, %s38
      %p47 = scmp.eq.s32.totalorder %s16, 1
      %p48 = por %p46, %p47
      %p49 = scmp.ne.s32.totalorder %s38, %s39
      %p50 = scmp.eq.s32.totalorder %s16, 0
      %p51 = por %p49, %p50
      %p52 = scmp.ne.s32.totalorder %s38, %s39
      %p53 = scmp.eq.s32.totalorder %s17, 1
      %p54 = por %p52, %p53
      %p56 = scmp.ne.s32.totalorder %s39, %s55
      %p57 = scmp.eq.s32.totalorder %s17, 0
      %p58 = por %p56, %p57
      %s59 = ssub.s32 %s18, %s30
      %s60 = ssub.s32 %s19, %s26
      %s61 = sor.u32 %s59, %s60
      %p62 = scmp.eq.s32.totalorder %s61, 0
      %s64 = sadd.s32 %s63, 1
      %s65 = scalar_select %p62, %s63, %s64
      %p68 = pneg %p62
      %p69 = scmp.eq.s32.totalorder %s11, 1
      %p70 = por %p68, %p69
      %p71 = scmp.ne.s32.totalorder %s63, %s66
      %p72 = scmp.eq.s32.totalorder %s11, 0
      %p73 = por %p71, %p72
      %p74 = scmp.ne.s32.totalorder %s63, %s66
      %p75 = scmp.eq.s32.totalorder %s16, 1
      %p76 = por %p74, %p75
      %p77 = scmp.ne.s32.totalorder %s66, %s67
      %p78 = scmp.eq.s32.totalorder %s16, 0
      %p79 = por %p77, %p78
      %p80 = scmp.ne.s32.totalorder %s66, %s67
      %p81 = scmp.eq.s32.totalorder %s17, 1
      %p82 = por %p80, %p81
      %p84 = scmp.ne.s32.totalorder %s67, %s83
      %p85 = scmp.eq.s32.totalorder %s17, 0
      %p86 = por %p84, %p85
      %s87 = ssub.s32 %s18, %s30
      %s88 = ssub.s32 %s19, %s26
      %s89 = sor.u32 %s87, %s88
      %p90 = scmp.eq.s32.totalorder %s89, 0
      %s92 = sadd.s32 %s91, 1
      %s93 = scalar_select %p90, %s91, %s92
      %p96 = pneg %p90
      %p97 = scmp.eq.s32.totalorder %s11, 1
      %p98 = por %p96, %p97
      %p99 = scmp.ne.s32.totalorder %s91, %s94
      %p100 = scmp.eq.s32.totalorder %s11, 0
      %p101 = por %p99, %p100
      %p102 = scmp.ne.s32.totalorder %s91, %s94
      %p103 = scmp.eq.s32.totalorder %s16, 1
      %p104 = por %p102, %p103
      %p105 = scmp.ne.s32.totalorder %s94, %s95
      %p106 = scmp.eq.s32.totalorder %s16, 0
      %p107 = por %p105, %p106
      %p108 = scmp.ne.s32.totalorder %s94, %s95
      %p109 = scmp.eq.s32.totalorder %s17, 1
      %p110 = por %p108, %p109
      %p112 = scmp.ne.s32.totalorder %s95, %s111
      %p113 = scmp.eq.s32.totalorder %s17, 0
      %p114 = por %p112, %p113
      %p115 = scmp.le.s32.totalorder 1, %s11
      %p116 = scmp.lt.s32.totalorder %s11, 3
      %p117 = pnand %p115, %p116
      %p118 = pneg %p117
      // Predicated region
      $region9: #{tpu_custom_call.1} parent=5 // pred_check
        _
      $region10: #{tpu_custom_call.1} parent=5 // pred_check_branch
        %120 = sbr.rel (%p117) target = $region12
      $region11: #{tpu_custom_call.1} parent=5 // pred_region
        %s121 = ssub.s32 %s11, 1
      $region12: #{tpu_custom_call.1} parent=5 // pred_fallthru
        _
      %p122 = scmp.lt.s32.totalorder %s11, 2
      // Predicated region
      $region13: #{tpu_custom_call.1} parent=5 // pred_check
        %p123 = pneg %p122
      $region14: #{tpu_custom_call.1} parent=5 // pred_check_branch
        %125 = sbr.rel (%p123) target = $region16
      $region15: #{tpu_custom_call.1} parent=5 // pred_region
        // Predicated region
        $region17: #{tpu_custom_call.1} parent=15 // pred_check
          %p126 = pneg %p45
        $region18: #{tpu_custom_call.1} parent=15 // pred_check_branch
          %128 = sbr.rel (%p126) target = $region20
        $region19: #{tpu_custom_call.1} parent=15 // pred_region
          %s129 = smul.u32 2, %s19
          %p130 = scmp.lt.s32.totalorder %s18, 1
          %s131 = scalar_select %p130, %s18, 1
          %p132 = scmp.lt.s32.totalorder %s129, 1
          %s133 = scalar_select %p132, %s129, 1
          %s134 = smul.addr %s131, 2
          %s135 = sadd.s32 %s133, %s134
          %s136 = smul.addr %s135, 8
          %s137 = scalar_lea.vmem %s0, %s136
          %s138 = smul.u32 2, %s19
        $region20: #{tpu_custom_call.1} parent=15 // pred_fallthru
          _
        // Predicated region
        $region21: #{tpu_custom_call.1} parent=15 // pred_check
          %p139 = pneg %p73
        $region22: #{tpu_custom_call.1} parent=15 // pred_check_branch
          %141 = sbr.rel (%p139) target = $region24
        $region23: #{tpu_custom_call.1} parent=15 // pred_region
          %s142 = smul.u32 2, %s19
          %p143 = scmp.lt.s32.totalorder %s18, 1
          %s144 = scalar_select %p143, %s18, 1
          %p145 = scmp.lt.s32.totalorder %s142, 1
          %s146 = scalar_select %p145, %s142, 1
          %s147 = smul.addr %s144, 2
          %s148 = sadd.s32 %s146, %s147
          %s149 = scalar_lea.vmem %s1, %s148
          %s150 = smul.u32 2, %s19
        $region24: #{tpu_custom_call.1} parent=15 // pred_fallthru
          _
      $region16: #{tpu_custom_call.1} parent=5 // pred_fallthru
        _
      %p151 = scmp.le.s32.totalorder 1, %s11
      %p152 = scmp.lt.s32.totalorder %s11, 3
      %p153 = pnand %p151, %p152
      %p154 = pneg %p153
      // Predicated region
      $region25: #{tpu_custom_call.1} parent=5 // pred_check
        _
      $region26: #{tpu_custom_call.1} parent=5 // pred_check_branch
        %156 = sbr.rel (%p153) target = $region28
      $region27: #{tpu_custom_call.1} parent=5 // pred_region
        %s157 = ssub.s32 %s11, 1
        %s158 = smul.u32 2, %s21
        %p159 = scmp.lt.s32.totalorder %s20, 1
        %s160 = scalar_select %p159, %s20, 1
        %p161 = scmp.lt.s32.totalorder %s158, 1
        %s162 = scalar_select %p161, %s158, 1
        %s163 = smul.addr %s160, 2
        %s164 = sadd.s32 %s162, %s163
        %s165 = smul.addr %s164, 8
        %s166 = scalar_lea.vmem %s0, %s165
        %p167 = pneg %p51
        %p168 = pneg %p48
        %s169 = smul.u32 2, %s21
        %p170 = scmp.lt.s32.totalorder %s20, 1
        %s171 = scalar_select %p170, %s20, 1
        %p172 = scmp.lt.s32.totalorder %s169, 1
        %s173 = scalar_select %p172, %s169, 1
        %s174 = smul.addr %s171, 2
        %s175 = sadd.s32 %s173, %s174
        %s176 = scalar_lea.vmem %s1, %s175
        %p177 = pneg %p79
        %p178 = pneg %p76
        %p179 = pneg %p107
        %p180 = pneg %p104
        %s181 = sand.u32 %s94, 1
        %s182 = scalar_lea.sflag [#allocation3], %s181
        %s183 = sand.u32 %s94, 1
        %s184 = smul.addr %s183, 8
        %s185 = scalar_lea.vmem [#allocation2], %s184
        %s186 = smul.u32 2, %s21
        %p187 = scmp.lt.s32.totalorder %s20, 1
        %s188 = scalar_select %p187, %s20, 1
        %p189 = scmp.lt.s32.totalorder %s186, 1
        %s190 = scalar_select %p189, %s186, 1
        %s191 = smul.addr %s188, 2
        %s192 = sadd.s32 %s190, %s191
        %s193 = smul.addr %s192, 8
        %s194 = scalar_lea.vmem %s0, %s193
        %s195 = smul.u32 2, %s21
        %s196 = smul.u32 2, %s21
        %p197 = scmp.lt.s32.totalorder %s20, 1
        %s198 = scalar_select %p197, %s20, 1
        %p199 = scmp.lt.s32.totalorder %s196, 1
        %s200 = scalar_select %p199, %s196, 1
        %s201 = smul.addr %s198, 2
        %s202 = sadd.s32 %s200, %s201
        %s203 = scalar_lea.vmem %s1, %s202
        %s204 = smul.u32 2, %s21
        %v205 = vld [vmem:[%s194] sm:$0x7f]
        %v206 = vld [vmem:[%s194 + $0x8] sm:$0x7f]
        %v207 = vld [vmem:[%s203] sm:$0x3]
        %vm208 = vcmask 1046528
        %v209 = vsel %vm208, %v205, -inf
        %v210 = vrot.slane %v209, 4
        %v211 = vmax.f32 %v209, %v210
        %v212 = vrot.slane %v211, 2
        %v213 = vmax.f32 %v211, %v212
        %v214 = vrot.slane %v213, 1
        %v215 = vmax.f32 %v213, %v214
        %v216 = vsel %vm208, %v206, -inf
        %v217 = vrot.slane %v216, 4
        %v218 = vmax.f32 %v216, %v217
        %v219 = vrot.slane %v218, 2
        %v220 = vmax.f32 %v218, %v219
        %v221 = vrot.slane %v220, 1
        %v222 = vmax.f32 %v220, %v221
        %v223 = vsub.f32 %v205, %v215
        %v224 = vsub.f32 %v206, %v222
        %v225 = vmul.f32 %v223, 1.442695
        %v226 = vpow.pop %v225
        %v227 = vmul.f32 %v224, 1.442695
        %v228 = vpow.pop %v227
        %v229 = vsel %vm208, %v226, 0.0
        %v230 = vrot.slane %v229, 4
        %v231 = vadd.f32 %v229, %v230
        %v232 = vrot.slane %v231, 2
        %v233 = vadd.f32 %v231, %v232
        %v234 = vrot.slane %v233, 1
        %v235 = vadd.f32 %v233, %v234
        %v236 = vsel %vm208, %v228, 0.0
        %v237 = vrot.slane %v236, 4
        %v238 = vadd.f32 %v236, %v237
        %v239 = vrot.slane %v238, 2
        %v240 = vadd.f32 %v238, %v239
        %v241 = vrot.slane %v240, 1
        %v242 = vadd.f32 %v240, %v241
        %v243 = vlog2.pop %v235
        %v244 = vmul.f32 %v243, 0.6931472
        %v245 = vlog2.pop %v242
        %v246 = vmul.f32 %v245, 0.6931472
        %v247 = vadd.f32 %v215, %v244
        %v248 = vadd.f32 %v222, %v246
        %vm249 = vcmp.eq.s32.totalorder %v207, 6
        %v250 = vsel %vm249, 0, %v207
        %v251 = vlaneseq
        %v252 = vshrl.u32 %v251, 7
        %v253 = vlaneseq
        %v254 = vshrl.u32 %v253, 7
        %v255 = vsub.s32 0, %v254
        %v256 = vrot.slane %v250, %v255
        %v257 = vlaneseq
        %v258 = vshrl.u32 %v257, 7
        %v259 = vsub.s32 1, %v258
        %v260 = vrot.slane %v250, %v259
        %vm261 = vcmp.eq.s32.totalorder %v252, %v256
        %vm262 = vcmp.eq.s32.totalorder %v252, %v260
        %v263 = vsel %vm261, %v205, 0.0
        %v264 = vsel %vm262, %v206, 0.0
        %v265 = vsel %vm208, %v263, 0.0
        %v266 = vrot.slane %v265, 4
        %v267 = vadd.f32 %v265, %v266
        %v268 = vrot.slane %v267, 2
        %v269 = vadd.f32 %v267, %v268
        %v270 = vrot.slane %v269, 1
        %v271 = vadd.f32 %v269, %v270
        %v272 = vsel %vm208, %v264, 0.0
        %v273 = vrot.slane %v272, 4
        %v274 = vadd.f32 %v272, %v273
        %v275 = vrot.slane %v274, 2
        %v276 = vadd.f32 %v274, %v275
        %v277 = vrot.slane %v276, 1
        %v278 = vadd.f32 %v276, %v277
        %v279 = vsub.f32 %v247, %v271
        %v280 = vsub.f32 %v248, %v278
        %v281 = vmax.f32 %v279, 0.0
        %v282 = vmax.f32 %v280, 0.0
        %vm283 = vcmp.ne.s32.totalorder %v207, 6
        %v286 = vcombine.low %v281, %v282
        %v288 = vunpack.c.l.s4 1966171168
        %v289 = vunpack.c.0.s8 %v288
        %v290 = vlaneseq
        %v291 = vshrl.u32 %v290, 7
        %v292 = vsub.s32 %v289, %v291
        %v293 = vrot.slane %v286, %v292
        %v295 = vunpack.c.l.s4 1966171168
        %v296 = vunpack.c.0.s8 %v295
        %v297 = vlaneseq
        %v298 = vshrl.u32 %v297, 7
        %v299 = vsub.s32 %v296, %v298
        %v300 = vrot.slane %v293, %v299
        %v302 = vsel %vm283, %v300, 0.0
        %v303 = vsub.f32 0.0, %v302
        %v304 = vmul.f32 %v303, 1.442695
        %v305 = vpow.pop %v304
        %v306 = vsub.f32 1.0, %v305
        %v307 = vmul.f32 %v302, 0.25
        %v308 = vmul.f32 %v306, %v306
        %v309 = vmul.f32 %v307, %v308
        %v311 = vlaneseq
        %v312 = vshrl.u32 %v311, 7
        %v313 = vsub.s32 0, %v312
        %v314 = vrot.slane %v309, %v313
        %v315 = vlaneseq
        %v316 = vshrl.u32 %v315, 7
        %v317 = vsub.s32 1, %v316
        %v318 = vrot.slane %v309, %v317
        %vm321 = vcmask 1040384
        %v322 = vsel %vm321, %v314, 0.0
        %v323 = vsel %vm321, %v318, 0.0
        %v324 = vadd.f32 %v322, %v323
        %325 = vadd.xlane.f32.xlu0 %v324
        %v326 = vpop.xlane.xlu0 %325
        %v327 = vrot.slane %v326, 4
        %v328 = vadd.f32 %v326, %v327
        %v329 = vrot.slane %v328, 2
        %v330 = vadd.f32 %v328, %v329
        %v331 = vrot.slane %v330, 1
        %v332 = vadd.f32 %v330, %v331
        %s333 = vtos %v332
        %v334 = vstv %s333
        %335 = vst [vmem:[%s185] sm:$0xff] %v334
        %s336 = sand.u32 %s94, 1
        %s337 = scalar_lea.sflag [#allocation3], %s336
        %s338 = sand.u32 %s94, 1
        %s339 = smul.addr %s338, 8
        %s340 = scalar_lea.vmem [#allocation2], %s339
        // Predicated region
        $region29: #{tpu_custom_call.1} parent=27 // pred_check
          %p341 = pneg %p104
        $region30: #{tpu_custom_call.1} parent=27 // pred_check_branch
          %343 = sbr.rel (%p341) target = $region32
        $region31: #{tpu_custom_call.1} parent=27 // pred_region
          %s345 = ssub.s32 128, 128
          %346 = vsyncadd %s337, %s345
          %s347 = sadd.s32 %s21, %s20
          %s348 = smul.addr %s347, 128
          %s349 = scalar_lea.hbm %s2, %s348
          %s351 = sshll.u32 %s340, 4
          %s352 = int_to_ptr.vmem [resolvable:$true] %s351
          %354 = dma.vmem_to_hbm [thread:$0]  %s352, 128, %s349, %s337
        $region32: #{tpu_custom_call.1} parent=27 // pred_fallthru
          _
      $region28: #{tpu_custom_call.1} parent=5 // pred_fallthru
        _
      %p355 = scmp.le.s32.totalorder 2, %s11
      // Predicated region
      $region33: #{tpu_custom_call.1} parent=5 // pred_check
        %p356 = pneg %p355
      $region34: #{tpu_custom_call.1} parent=5 // pred_check_branch
        %358 = sbr.rel (%p356) target = $region36
      $region35: #{tpu_custom_call.1} parent=5 // pred_region
        %s359 = ssub.s32 %s11, 2
        // Predicated region
        $region37: #{tpu_custom_call.1} parent=35 // pred_check
          %p360 = pneg %p110
        $region38: #{tpu_custom_call.1} parent=35 // pred_check_branch
          %362 = sbr.rel (%p360) target = $region40
        $region39: #{tpu_custom_call.1} parent=35 // pred_region
          %s363 = sand.u32 %s95, 1
          %s364 = scalar_lea.sflag [#allocation3], %s363
          %s365 = sand.u32 %s95, 1
          %s366 = smul.addr %s365, 8
          %s367 = scalar_lea.vmem [#allocation2], %s366
          %368 = dma.done %s364, 128
        $region40: #{tpu_custom_call.1} parent=35 // pred_fallthru
          _
      $region36: #{tpu_custom_call.1} parent=5 // pred_fallthru
        _
    $region6: #{tpu_custom_call.1} parent=1 // loop_footer
      %s15 = sadd.s32 1, %s11
    $region7: #{tpu_custom_call.1} parent=1 // loop_footer_branch
      %10 = sbr.rel target = $region3
    $region8: #{tpu_custom_call.1} parent=1 // loop_exit
      _
    %369 = vsyncpa [#allocation3], 1
    %s370 = scalar_lea.sflag [#allocation3], 1
    %371 = vsyncpa %s370, 1

</llo_original>
